<compile_context>
chip_gen: v7x
topology: tpu7x:2x2x1
jax: 0.10.0
libtpu: 0.0.40
codegen_flags: <defaults>
</compile_context>

<pallas_src>
import functools

import jax
import jax.numpy as jnp
from jax.experimental import pallas as pl
from jax.experimental.pallas import tpu as pltpu

LANE = 128      # TPU vreg lane width
SUBLANE = 8     # TPU vreg sublane count


def _round_up(x, m):
    return ((x + m - 1) // m) * m


def _pad_axis(x, axis, target):
    pad = target - x.shape[axis]
    if pad == 0:
        return x
    widths = [(0, 0)] * x.ndim
    widths[axis] = (0, pad)
    return jnp.pad(x, widths)


def _fusion_kernel(pmi_ref, cos_ref, euc_ref, co_ref,
                   w1_ref, w2_ref, w3_ref, w4_ref, b_ref, o_ref):
    # Four partial matmuls (one per feature source) accumulated in f32 — this is
    # mathematically identical to concat(features) @ W_t but avoids any lane-axis
    # concat / relayout inside the kernel.
    acc = jnp.dot(pmi_ref[...], w1_ref[...], preferred_element_type=jnp.float32)
    acc = acc + jnp.dot(cos_ref[...], w2_ref[...], preferred_element_type=jnp.float32)
    acc = acc + jnp.dot(euc_ref[...], w3_ref[...], preferred_element_type=jnp.float32)
    acc = acc + jnp.dot(co_ref[...], w4_ref[...], preferred_element_type=jnp.float32)
    o_ref[...] = (acc + b_ref[...]).astype(o_ref.dtype)


def prepare_fusion_params(weight, bias, feature_dims):
    """One-time parameter preparation (do NOT call per forward pass).

    weight: (out_d, input_d) as in nn.Linear.  bias: (out_d,).
    feature_dims: per-source feature widths (d_pmi, d_cos, d_euc, d_co).

    Returns ((w1, w2, w3, w4), bias_2d_padded, out_d) where each w_i is
    (d_i, n_pad) with n_pad = round_up(out_d, 128) and the extra columns are zero.
    """
    out_d, input_d = weight.shape
    assert sum(feature_dims) == input_d, "feature dims must sum to weight's input_d"
    n_pad = _round_up(out_d, LANE)

    w_t = jnp.asarray(weight).T                       # (input_d, out_d), done once
    w_t = _pad_axis(w_t, 1, n_pad).astype(jnp.float32)  # lane-dense N

    splits = []
    off = 0
    for d in feature_dims:
        splits.append(w_t[off:off + d, :])
        off += d

    b2 = _pad_axis(jnp.asarray(bias).reshape(1, out_d), 1, n_pad).astype(jnp.float32)
    return tuple(splits), b2, out_d


def fusion_forward(pmi, cos, euc, co, params, *,
                   block_rows=512, min_rows_for_pallas=256, force_pallas=False):
    """pmi/cos/euc/co: (B, d_i) float32.  params: from prepare_fusion_params.
    Returns logits (B, out_d) == concat(pmi,cos,euc,co) @ W.T + b."""
    (w1, w2, w3, w4), b2, out_d = params
    B = pmi.shape[0]
    dtype = pmi.dtype
    n_pad = b2.shape[1]
    dims = (pmi.shape[1], cos.shape[1], euc.shape[1], co.shape[1])
    assert (w1.shape[0], w2.shape[0], w3.shape[0], w4.shape[0]) == dims

    # Tiny problems: XLA fuses this for free; the kernel launch cost would dominate.
    if (not force_pallas) and B < min_rows_for_pallas:
        x = jnp.concatenate([pmi, cos, euc, co], axis=1)
        w_full = jnp.concatenate([w1, w2, w3, w4], axis=0)     # (input_d, n_pad)
        return (x @ w_full + b2)[:, :out_d].astype(dtype)

    # Batch tiling: largest tile up to block_rows, padded so it divides the batch.
    tm = min(block_rows, _round_up(B, SUBLANE))
    tm = _round_up(tm, SUBLANE)
    n_blocks = pl.cdiv(B, tm)
    b_pad = n_blocks * tm

    pmi_p = _pad_axis(pmi, 0, b_pad)
    cos_p = _pad_axis(cos, 0, b_pad)
    euc_p = _pad_axis(euc, 0, b_pad)
    co_p = _pad_axis(co, 0, b_pad)

    feat_spec = lambda d: pl.BlockSpec((tm, d), lambda i: (i, 0))       # batch-tiled
    resident = lambda shp: pl.BlockSpec(shp, lambda i: (0, 0))          # VMEM-resident

    out = pl.pallas_call(
        _fusion_kernel,
        out_shape=jax.ShapeDtypeStruct((b_pad, n_pad), dtype),
        grid=(n_blocks,),
        in_specs=[
            feat_spec(dims[0]),
            feat_spec(dims[1]),
            feat_spec(dims[2]),
            feat_spec(dims[3]),
            resident(w1.shape),
            resident(w2.shape),
            resident(w3.shape),
            resident(w4.shape),
            resident(b2.shape),
        ],
        out_specs=pl.BlockSpec((tm, n_pad), lambda i: (i, 0)),
        compiler_params=pltpu.CompilerParams(
            dimension_semantics=("parallel",),          # megacore-shardable batch axis
            vmem_limit_bytes=32 * 1024 * 1024,          # safe on v5e/v6e/v7x; tiny working set
        ),
    )(pmi_p, cos_p, euc_p, co_p, w1, w2, w3, w4, b2)

    return out[:B, :out_d]


if __name__ == "__main__":
    key = jax.random.PRNGKey(0)
    k1, k2, k3, k4, kw, kb = jax.random.split(key, 6)

    B = 8          # batch of documents
    d_each = 8     # per-source feature dim
    input_d = 4 * d_each   # 32, matches Fusion(input_d, out_d)
    out_d = 16

    pmi = jax.random.normal(k1, (B, d_each), dtype=jnp.float32)
    cos = jax.random.normal(k2, (B, d_each), dtype=jnp.float32)
    euc = jax.random.normal(k3, (B, d_each), dtype=jnp.float32)
    co = jax.random.normal(k4, (B, d_each), dtype=jnp.float32)

    # Deterministic synthetic parameters (like nn.Linear's uniform init).
    bound = 1.0 / (input_d ** 0.5)
    weight = jax.random.uniform(kw, (out_d, input_d), jnp.float32, -bound, bound)
    bias = jax.random.uniform(kb, (out_d,), jnp.float32, -bound, bound)

    # One-time parameter prep (transpose + split + lane-pad).
    params = prepare_fusion_params(weight, bias, (d_each, d_each, d_each, d_each))

    # Reference in plain JAX.
    x = jnp.concatenate([pmi, cos, euc, co], axis=1)
    ref = x @ weight.T + bias

    # Force the Pallas path so the kernel is exercised even at this toy size.
    logits = fusion_forward(pmi, cos, euc, co, params, force_pallas=True)
    jax.block_until_ready(logits)
    assert logits.shape == (B, out_d)
    assert jnp.allclose(logits, ref, atol=1e-5, rtol=1e-5)

    # Also check a batch that is not a multiple of the tile (exercises padding path).
    B2 = 13
    kk = jax.random.split(key, 4)
    p2, c2, e2, o2 = (jax.random.normal(kk[i], (B2, d_each), jnp.float32) for i in range(4))
    ref2 = jnp.concatenate([p2, c2, e2, o2], axis=1) @ weight.T + bias
    out2 = fusion_forward(p2, c2, e2, o2, params, force_pallas=True)
    jax.block_until_ready(out2)
    assert out2.shape == (B2, out_d)
    assert jnp.allclose(out2, ref2, atol=1e-5, rtol=1e-5)

    print("KERNEL_OK")
</pallas_src>

<mosaic_0001>
module attributes {stable_mosaic.version = 11 : i64} {
  func.func @_fusion_kernel(%arg0: i32, %arg1: memref<8x8xf32, #tpu.memory_space<vmem>>, %arg2: memref<8x8xf32, #tpu.memory_space<vmem>>, %arg3: memref<8x8xf32, #tpu.memory_space<vmem>>, %arg4: memref<8x8xf32, #tpu.memory_space<vmem>>, %arg5: memref<8x128xf32, #tpu.memory_space<vmem>>, %arg6: memref<8x128xf32, #tpu.memory_space<vmem>>, %arg7: memref<8x128xf32, #tpu.memory_space<vmem>>, %arg8: memref<8x128xf32, #tpu.memory_space<vmem>>, %arg9: memref<1x128xf32, #tpu.memory_space<vmem>>, %arg10: memref<8x128xf32, #tpu.memory_space<vmem>>) attributes {dimension_semantics = [#tpu.dimension_semantics<parallel>], iteration_bounds = array<i64: 1>, scalar_prefetch = 0 : i64, scratch_operands = 0 : i64, tpu.core_type = #tpu.core_type<tc>, window_params = [{transform_indices = @transform_0, window_bounds = array<i64: 8, 8>}, {transform_indices = @transform_1, window_bounds = array<i64: 8, 8>}, {transform_indices = @transform_2, window_bounds = array<i64: 8, 8>}, {transform_indices = @transform_3, window_bounds = array<i64: 8, 8>}, {pipeline_mode = #tpu.pipeline_mode<synchronous>, transform_indices = @transform_4, window_bounds = array<i64: 8, 128>}, {pipeline_mode = #tpu.pipeline_mode<synchronous>, transform_indices = @transform_5, window_bounds = array<i64: 8, 128>}, {pipeline_mode = #tpu.pipeline_mode<synchronous>, transform_indices = @transform_6, window_bounds = array<i64: 8, 128>}, {pipeline_mode = #tpu.pipeline_mode<synchronous>, transform_indices = @transform_7, window_bounds = array<i64: 8, 128>}, {pipeline_mode = #tpu.pipeline_mode<synchronous>, transform_indices = @transform_8, window_bounds = array<i64: 1, 128>}, {transform_indices = @transform_9, window_bounds = array<i64: 8, 128>}]} {
    %c0 = arith.constant 0 : index
    %c0_0 = arith.constant 0 : index
    %0 = vector.load %arg1[%c0, %c0_0] : memref<8x8xf32, #tpu.memory_space<vmem>>, vector<8x8xf32>
    %c0_1 = arith.constant 0 : index
    %c0_2 = arith.constant 0 : index
    %1 = vector.load %arg5[%c0_1, %c0_2] : memref<8x128xf32, #tpu.memory_space<vmem>>, vector<8x128xf32>
    %cst = arith.constant dense<0.000000e+00> : vector<8x128xf32>
    %2 = tpu.matmul %0, %1, %cst {dimension_numbers = #tpu.dot_dimension_numbers<[1], [0], [0], [1], [0, 0, 1, 1], [], []>} : vector<8x8xf32>, vector<8x128xf32>, vector<8x128xf32> -> vector<8x128xf32>
    %c0_3 = arith.constant 0 : index
    %c0_4 = arith.constant 0 : index
    %3 = vector.load %arg2[%c0_3, %c0_4] : memref<8x8xf32, #tpu.memory_space<vmem>>, vector<8x8xf32>
    %c0_5 = arith.constant 0 : index
    %c0_6 = arith.constant 0 : index
    %4 = vector.load %arg6[%c0_5, %c0_6] : memref<8x128xf32, #tpu.memory_space<vmem>>, vector<8x128xf32>
    %cst_7 = arith.constant dense<0.000000e+00> : vector<8x128xf32>
    %5 = tpu.matmul %3, %4, %cst_7 {dimension_numbers = #tpu.dot_dimension_numbers<[1], [0], [0], [1], [0, 0, 1, 1], [], []>} : vector<8x8xf32>, vector<8x128xf32>, vector<8x128xf32> -> vector<8x128xf32>
    %6 = arith.addf %2, %5 : vector<8x128xf32>
    %c0_8 = arith.constant 0 : index
    %c0_9 = arith.constant 0 : index
    %7 = vector.load %arg3[%c0_8, %c0_9] : memref<8x8xf32, #tpu.memory_space<vmem>>, vector<8x8xf32>
    %c0_10 = arith.constant 0 : index
    %c0_11 = arith.constant 0 : index
    %8 = vector.load %arg7[%c0_10, %c0_11] : memref<8x128xf32, #tpu.memory_space<vmem>>, vector<8x128xf32>
    %cst_12 = arith.constant dense<0.000000e+00> : vector<8x128xf32>
    %9 = tpu.matmul %7, %8, %cst_12 {dimension_numbers = #tpu.dot_dimension_numbers<[1], [0], [0], [1], [0, 0, 1, 1], [], []>} : vector<8x8xf32>, vector<8x128xf32>, vector<8x128xf32> -> vector<8x128xf32>
    %10 = arith.addf %6, %9 : vector<8x128xf32>
    %c0_13 = arith.constant 0 : index
    %c0_14 = arith.constant 0 : index
    %11 = vector.load %arg4[%c0_13, %c0_14] : memref<8x8xf32, #tpu.memory_space<vmem>>, vector<8x8xf32>
    %c0_15 = arith.constant 0 : index
    %c0_16 = arith.constant 0 : index
    %12 = vector.load %arg8[%c0_15, %c0_16] : memref<8x128xf32, #tpu.memory_space<vmem>>, vector<8x128xf32>
    %cst_17 = arith.constant dense<0.000000e+00> : vector<8x128xf32>
    %13 = tpu.matmul %11, %12, %cst_17 {dimension_numbers = #tpu.dot_dimension_numbers<[1], [0], [0], [1], [0, 0, 1, 1], [], []>} : vector<8x8xf32>, vector<8x128xf32>, vector<8x128xf32> -> vector<8x128xf32>
    %14 = arith.addf %10, %13 : vector<8x128xf32>
    %c0_18 = arith.constant 0 : index
    %c0_19 = arith.constant 0 : index
    %15 = vector.load %arg9[%c0_18, %c0_19] : memref<1x128xf32, #tpu.memory_space<vmem>>, vector<1x128xf32>
    %16 = vector.broadcast %15 : vector<1x128xf32> to vector<8x128xf32>
    %17 = arith.addf %14, %16 : vector<8x128xf32>
    %c0_20 = arith.constant 0 : index
    %c0_21 = arith.constant 0 : index
    %18 = vector.load %arg10[%c0_20, %c0_21] : memref<8x128xf32, #tpu.memory_space<vmem>>, vector<8x128xf32>
    tpu.vector_store %arg10[%c0_20, %c0_21], %17 {strides = array<i32>} : memref<8x128xf32, #tpu.memory_space<vmem>>, vector<8x128xf32>,
    return
  }
  func.func @transform_0(%arg0: i32) -> (i32, i32) {
    %c0_i32 = arith.constant 0 : i32
    %c0_i32_0 = arith.constant 0 : i32
    return %arg0, %c0_i32 : i32, i32
  }
  func.func @transform_1(%arg0: i32) -> (i32, i32) {
    %c0_i32 = arith.constant 0 : i32
    %c0_i32_0 = arith.constant 0 : i32
    return %arg0, %c0_i32 : i32, i32
  }
  func.func @transform_2(%arg0: i32) -> (i32, i32) {
    %c0_i32 = arith.constant 0 : i32
    %c0_i32_0 = arith.constant 0 : i32
    return %arg0, %c0_i32 : i32, i32
  }
  func.func @transform_3(%arg0: i32) -> (i32, i32) {
    %c0_i32 = arith.constant 0 : i32
    %c0_i32_0 = arith.constant 0 : i32
    return %arg0, %c0_i32 : i32, i32
  }
  func.func @transform_4(%arg0: i32) -> (i32, i32) {
    %c0_i32 = arith.constant 0 : i32
    %c0_i32_0 = arith.constant 0 : i32
    %c0_i32_1 = arith.constant 0 : i32
    return %c0_i32, %c0_i32_0 : i32, i32
  }
  func.func @transform_5(%arg0: i32) -> (i32, i32) {
    %c0_i32 = arith.constant 0 : i32
    %c0_i32_0 = arith.constant 0 : i32
    %c0_i32_1 = arith.constant 0 : i32
    return %c0_i32, %c0_i32_0 : i32, i32
  }
  func.func @transform_6(%arg0: i32) -> (i32, i32) {
    %c0_i32 = arith.constant 0 : i32
    %c0_i32_0 = arith.constant 0 : i32
    %c0_i32_1 = arith.constant 0 : i32
    return %c0_i32, %c0_i32_0 : i32, i32
  }
  func.func @transform_7(%arg0: i32) -> (i32, i32) {
    %c0_i32 = arith.constant 0 : i32
    %c0_i32_0 = arith.constant 0 : i32
    %c0_i32_1 = arith.constant 0 : i32
    return %c0_i32, %c0_i32_0 : i32, i32
  }
  func.func @transform_8(%arg0: i32) -> (i32, i32) {
    %c0_i32 = arith.constant 0 : i32
    %c0_i32_0 = arith.constant 0 : i32
    %c0_i32_1 = arith.constant 0 : i32
    return %c0_i32, %c0_i32_0 : i32, i32
  }
  func.func @transform_9(%arg0: i32) -> (i32, i32) {
    %c0_i32 = arith.constant 0 : i32
    %c0_i32_0 = arith.constant 0 : i32
    return %arg0, %c0_i32 : i32, i32
  }
}

</mosaic_0001>

<llo_original>
// kernel: tpu_custom_call.1
$region0: #{tpu_custom_call.1}
  #allocation0 [shape = 'u32[]', space=smem, size = 0x4, offset = 0x4, fixed_abs, tag = 'smem constant byte address 0x4 - core index']
  #allocation1 [shape = 'u32[144,128]{1,0:T(1,128)}', space=vmem, size = 0x12000, scoped, tag = 'internal scratch']
  %s0 = inlined_call_operand.hbm [shape: f32[8,8], index: 0, kind: input, shape index: {}]
  %s1 = inlined_call_operand.hbm [shape: f32[8,8], index: 1, kind: input, shape index: {}]
  %s2 = inlined_call_operand.hbm [shape: f32[8,8], index: 2, kind: input, shape index: {}]
  %s3 = inlined_call_operand.vmem [shape: f32[8,8], index: 3, kind: input, shape index: {}]
  %s4 = inlined_call_operand.hbm [shape: f32[8,128], index: 4, kind: input, shape index: {}]
  %s5 = inlined_call_operand.vmem [shape: f32[8,128], index: 5, kind: input, shape index: {}]
  %s6 = inlined_call_operand.hbm [shape: f32[8,128], index: 6, kind: input, shape index: {}]
  %s7 = inlined_call_operand.vmem [shape: f32[8,128], index: 7, kind: input, shape index: {}]
  %s8 = inlined_call_operand.vmem [shape: f32[1,128], index: 8, kind: input, shape index: {}]
  %s9 = inlined_call_operand.hbm [shape: f32[8,128], index: 9, kind: output, shape index: {}]
  %s10 = sld [smem:[#allocation0]]
  $region66: #{tpu_custom_call.1} parent=0
    _
  %s12 = ssub.s32 1, %s10
  %s13 = scalar_select 0, %s12, %s10
  $region1: #{tpu_custom_call.1} parent=0
    #allocation2 [shape = 'u8[4096]{0}', space=vmem, size = 0x1000, scoped, tag = 'input window, operand 0, single buffered']
    #allocation3 [shape = 's32[1]{0}', space=sflag, size = 0x4, scoped, tag = 'scoped memory for tpu_custom_call.1']
    #allocation4 [shape = 's32[1]{0}', space=sflag, size = 0x4, scoped, tag = 'scoped memory for tpu_custom_call.1']
    #allocation5 [shape = 'u8[4096]{0}', space=vmem, size = 0x1000, scoped, tag = 'input window, operand 1, single buffered']
    #allocation6 [shape = 's32[1]{0}', space=sflag, size = 0x4, scoped, tag = 'scoped memory for tpu_custom_call.1']
    #allocation7 [shape = 'u8[4096]{0}', space=vmem, size = 0x1000, scoped, tag = 'input window, operand 2, single buffered']
    #allocation8 [shape = 'u8[4096]{0}', space=vmem, size = 0x1000, scoped, tag = 'input window, operand 4, single buffered']
    #allocation9 [shape = 's32[1]{0}', space=sflag, size = 0x4, scoped, tag = 'scoped memory for tpu_custom_call.1']
    #allocation10 [shape = 'u8[4096]{0}', space=vmem, size = 0x1000, scoped, tag = 'input window, operand 6, single buffered']
    #allocation11 [shape = 'u8[4096]{0}', space=vmem, size = 0x1000, scoped, tag = 'output window, operand 0, single buffered']
    %14 = vsyncpa [#allocation3], 0
    %15 = vsyncpa [#allocation6], 0
    %16 = vsyncpa [#allocation9], 0
    %17 = vsyncpa [#allocation4], 0
    // Predicated region
    $region2: #{tpu_custom_call.1} parent=1 // pred_check
      _
    $region3: #{tpu_custom_call.1} parent=1 // pred_check_branch
      %19 = sbr.rel (0) target = $region5
    $region4: #{tpu_custom_call.1} parent=1 // pred_region
      %s21 = ssub.s32 128, 128
      %22 = vsyncadd [#allocation3], %s21
      %s24 = sshll.u32 [#allocation2], 4
      %s25 = int_to_ptr.vmem [resolvable:$true] %s24
      %27 = dma.hbm_to_vmem [thread:$0]  %s0, 128, %s25, [#allocation3]
    $region5: #{tpu_custom_call.1} parent=1 // pred_fallthru
      _
    // Predicated region
    $region6: #{tpu_custom_call.1} parent=1 // pred_check
      _
    $region7: #{tpu_custom_call.1} parent=1 // pred_check_branch
      %29 = sbr.rel (0) target = $region9
    $region8: #{tpu_custom_call.1} parent=1 // pred_region
      %s31 = ssub.s32 128, 128
      %32 = vsyncadd [#allocation6], %s31
      %s34 = sshll.u32 [#allocation5], 4
      %s35 = int_to_ptr.vmem [resolvable:$true] %s34
      %37 = dma.hbm_to_vmem [thread:$0]  %s1, 128, %s35, [#allocation6]
    $region9: #{tpu_custom_call.1} parent=1 // pred_fallthru
      _
    // Predicated region
    $region10: #{tpu_custom_call.1} parent=1 // pred_check
      _
    $region11: #{tpu_custom_call.1} parent=1 // pred_check_branch
      %39 = sbr.rel (0) target = $region13
    $region12: #{tpu_custom_call.1} parent=1 // pred_region
      %s41 = ssub.s32 128, 128
      %42 = vsyncadd [#allocation6], %s41
      %s44 = sshll.u32 [#allocation7], 4
      %s45 = int_to_ptr.vmem [resolvable:$true] %s44
      %47 = dma.hbm_to_vmem [thread:$0]  %s2, 128, %s45, [#allocation6]
    $region13: #{tpu_custom_call.1} parent=1 // pred_fallthru
      _
    // Predicated region
    $region14: #{tpu_custom_call.1} parent=1 // pred_check
      _
    $region15: #{tpu_custom_call.1} parent=1 // pred_check_branch
      %49 = sbr.rel (0) target = $region17
    $region16: #{tpu_custom_call.1} parent=1 // pred_region
      _
    $region17: #{tpu_custom_call.1} parent=1 // pred_fallthru
      _
    // Predicated region
    $region18: #{tpu_custom_call.1} parent=1 // pred_check
      _
    $region19: #{tpu_custom_call.1} parent=1 // pred_check_branch
      %51 = sbr.rel (0) target = $region21
    $region20: #{tpu_custom_call.1} parent=1 // pred_region
      %s53 = ssub.s32 128, 128
      %54 = vsyncadd [#allocation9], %s53
      %s56 = sshll.u32 [#allocation8], 4
      %s57 = int_to_ptr.vmem [resolvable:$true] %s56
      %59 = dma.hbm_to_vmem [thread:$0]  %s4, 128, %s57, [#allocation9]
    $region21: #{tpu_custom_call.1} parent=1 // pred_fallthru
      _
    // Predicated region
    $region22: #{tpu_custom_call.1} parent=1 // pred_check
      _
    $region23: #{tpu_custom_call.1} parent=1 // pred_check_branch
      %61 = sbr.rel (0) target = $region25
    $region24: #{tpu_custom_call.1} parent=1 // pred_region
      _
    $region25: #{tpu_custom_call.1} parent=1 // pred_fallthru
      _
    // Predicated region
    $region26: #{tpu_custom_call.1} parent=1 // pred_check
      _
    $region27: #{tpu_custom_call.1} parent=1 // pred_check_branch
      %63 = sbr.rel (0) target = $region29
    $region28: #{tpu_custom_call.1} parent=1 // pred_region
      %s65 = ssub.s32 128, 128
      %66 = vsyncadd [#allocation9], %s65
      %s68 = sshll.u32 [#allocation10], 4
      %s69 = int_to_ptr.vmem [resolvable:$true] %s68
      %71 = dma.hbm_to_vmem [thread:$0]  %s6, 128, %s69, [#allocation9]
    $region29: #{tpu_custom_call.1} parent=1 // pred_fallthru
      _
    // Predicated region
    $region30: #{tpu_custom_call.1} parent=1 // pred_check
      _
    $region31: #{tpu_custom_call.1} parent=1 // pred_check_branch
      %73 = sbr.rel (0) target = $region33
    $region32: #{tpu_custom_call.1} parent=1 // pred_region
      _
    $region33: #{tpu_custom_call.1} parent=1 // pred_fallthru
      _
    // Predicated region
    $region34: #{tpu_custom_call.1} parent=1 // pred_check
      _
    $region35: #{tpu_custom_call.1} parent=1 // pred_check_branch
      %75 = sbr.rel (0) target = $region37
    $region36: #{tpu_custom_call.1} parent=1 // pred_region
      _
    $region37: #{tpu_custom_call.1} parent=1 // pred_fallthru
      _
    // Predicated region
    $region38: #{tpu_custom_call.1} parent=1 // pred_check
      _
    $region39: #{tpu_custom_call.1} parent=1 // pred_check_branch
      %77 = sbr.rel (0) target = $region41
    $region40: #{tpu_custom_call.1} parent=1 // pred_region
      %78 = dma.done [#allocation3], 128
    $region41: #{tpu_custom_call.1} parent=1 // pred_fallthru
      _
    // Predicated region
    $region42: #{tpu_custom_call.1} parent=1 // pred_check
      _
    $region43: #{tpu_custom_call.1} parent=1 // pred_check_branch
      %80 = sbr.rel (0) target = $region45
    $region44: #{tpu_custom_call.1} parent=1 // pred_region
      %81 = dma.done [#allocation6], 128
    $region45: #{tpu_custom_call.1} parent=1 // pred_fallthru
      _
    // Predicated region
    $region46: #{tpu_custom_call.1} parent=1 // pred_check
      _
    $region47: #{tpu_custom_call.1} parent=1 // pred_check_branch
      %83 = sbr.rel (0) target = $region49
    $region48: #{tpu_custom_call.1} parent=1 // pred_region
      %84 = dma.done [#allocation6], 128
    $region49: #{tpu_custom_call.1} parent=1 // pred_fallthru
      _
    // Predicated region
    $region50: #{tpu_custom_call.1} parent=1 // pred_check
      _
    $region51: #{tpu_custom_call.1} parent=1 // pred_check_branch
      %86 = sbr.rel (0) target = $region53
    $region52: #{tpu_custom_call.1} parent=1 // pred_region
      %87 = dma.done [#allocation9], 128
    $region53: #{tpu_custom_call.1} parent=1 // pred_fallthru
      _
    // Predicated region
    $region54: #{tpu_custom_call.1} parent=1 // pred_check
      _
    $region55: #{tpu_custom_call.1} parent=1 // pred_check_branch
      %89 = sbr.rel (0) target = $region57
    $region56: #{tpu_custom_call.1} parent=1 // pred_region
      %90 = dma.done [#allocation9], 128
    $region57: #{tpu_custom_call.1} parent=1 // pred_fallthru
      _
    %v91 = vld [vmem:[#allocation2] sm:$0xff]
    %v92 = vld [vmem:[#allocation8] sm:$0xff]
    %v93 = vld [vmem:[#allocation5] sm:$0xff]
    %v94 = vld [vmem:[%s5] sm:$0xff]
    %vm95 = vcmask 64512
    %v97 = vsel %vm95, %v93, 0
    %99 = vmatprep.subr.mxu0 0.0
    %100 = vmatpush1.msra.mxu0 %v94
    %101 = vmatprep.subr.mxu0 0.0
    %102 = vmatpush1.msra.mxu0 0.0
    %103 = vmatprep.subr.mxu0 0.0
    %104 = vmatpush1.msra.mxu0 0.0
    %105 = vmatprep.subr.mxu0 0.0
    %106 = vmatpush1.msra.mxu0 0.0
    %107 = vmatprep.subr.mxu0 0.0
    %108 = vmatpush1.msra.mxu0 0.0
    %109 = vmatprep.subr.mxu0 0.0
    %110 = vmatpush1.msra.mxu0 0.0
    %111 = vmatprep.subr.mxu0 0.0
    %112 = vmatpush1.msra.mxu0 0.0
    %113 = vmatprep.subr.mxu0 0.0
    %114 = vmatpush1.msra.mxu0 0.0
    %115 = vmatprep.subr.mxu0 0.0
    %116 = vmatpush1.msra.mxu0 0.0
    %117 = vmatprep.subr.mxu0 0.0
    %118 = vmatpush1.msra.mxu0 0.0
    %119 = vmatprep.subr.mxu0 0.0
    %120 = vmatpush1.msra.mxu0 0.0
    %121 = vmatprep.subr.mxu0 0.0
    %122 = vmatpush1.msra.mxu0 0.0
    %123 = vmatprep.subr.mxu0 0.0
    %124 = vmatpush1.msra.mxu0 0.0
    %125 = vmatprep.subr.mxu0 0.0
    %126 = vmatpush1.msra.mxu0 0.0
    %127 = vmatprep.subr.mxu0 0.0
    %128 = vmatpush1.msra.mxu0 0.0
    %129 = vmatprep.subr.mxu0 0.0
    %130 = vmatpush1.msra.mxu0 0.0
    %131 = vmatprep.subr.mxu0 0.0
    %132 = vmatpush1.msra.mxu0 0.0
    %133 = vmatprep.subr.mxu0 0.0
    %134 = vmatpush1.msra.mxu0 0.0
    %135 = vmatprep.subr.mxu0 0.0
    %136 = vmatpush1.msra.mxu0 0.0
    %137 = vmatprep.subr.mxu0 0.0
    %138 = vmatpush1.msra.mxu0 0.0
    %139 = vmatprep.subr.mxu0 0.0
    %140 = vmatpush1.msra.mxu0 0.0
    %141 = vmatprep.subr.mxu0 0.0
    %142 = vmatpush1.msra.mxu0 0.0
    %143 = vmatprep.subr.mxu0 0.0
    %144 = vmatpush1.msra.mxu0 0.0
    %145 = vmatprep.subr.mxu0 0.0
    %146 = vmatpush1.msra.mxu0 0.0
    %147 = vmatprep.subr.mxu0 0.0
    %148 = vmatpush1.msra.mxu0 0.0
    %149 = vmatprep.subr.mxu0 0.0
    %150 = vmatpush1.msra.mxu0 0.0
    %151 = vmatprep.subr.mxu0 0.0
    %152 = vmatpush1.msra.mxu0 0.0
    %153 = vmatprep.subr.mxu0 0.0
    %154 = vmatpush1.msra.mxu0 0.0
    %155 = vmatprep.subr.mxu0 0.0
    %156 = vmatpush1.msra.mxu0 0.0
    %157 = vmatprep.subr.mxu0 0.0
    %158 = vmatpush1.msra.mxu0 0.0
    %159 = vmatprep.subr.mxu0 0.0
    %160 = vmatpush1.msra.mxu0 0.0
    %161 = vmatprep.subr.mxu0 0.0
    %162 = vmatpush1.msra.mxu0 0.0
    %163 = vmatprep.mubr.f32.mxu0 0.0
    %164 = vmatmul.mubr.f32.gmra.mrb[0].mxu0 %v97
    %v165 = vpop.f32.mrb[0].mxu0
    %v166 = vadd.f32 0.0, %v165
    %v167 = vpop.f32.mrb[0].mxu0
    %168 = vdwg.mxu0
    %v170 = vsel %vm95, %v91, 0
    %172 = vmatprep.subr.mxu0 0.0
    %173 = vmatpush1.msra.mxu0 %v92
    %174 = vmatprep.subr.mxu0 0.0
    %175 = vmatpush1.msra.mxu0 0.0
    %176 = vmatprep.subr.mxu0 0.0
    %177 = vmatpush1.msra.mxu0 0.0
    %178 = vmatprep.subr.mxu0 0.0
    %179 = vmatpush1.msra.mxu0 0.0
    %180 = vmatprep.subr.mxu0 0.0
    %181 = vmatpush1.msra.mxu0 0.0
    %182 = vmatprep.subr.mxu0 0.0
    %183 = vmatpush1.msra.mxu0 0.0
    %184 = vmatprep.subr.mxu0 0.0
    %185 = vmatpush1.msra.mxu0 0.0
    %186 = vmatprep.subr.mxu0 0.0
    %187 = vmatpush1.msra.mxu0 0.0
    %188 = vmatprep.subr.mxu0 0.0
    %189 = vmatpush1.msra.mxu0 0.0
    %190 = vmatprep.subr.mxu0 0.0
    %191 = vmatpush1.msra.mxu0 0.0
    %192 = vmatprep.subr.mxu0 0.0
    %193 = vmatpush1.msra.mxu0 0.0
    %194 = vmatprep.subr.mxu0 0.0
    %195 = vmatpush1.msra.mxu0 0.0
    %196 = vmatprep.subr.mxu0 0.0
    %197 = vmatpush1.msra.mxu0 0.0
    %198 = vmatprep.subr.mxu0 0.0
    %199 = vmatpush1.msra.mxu0 0.0
    %200 = vmatprep.subr.mxu0 0.0
    %201 = vmatpush1.msra.mxu0 0.0
    %202 = vmatprep.subr.mxu0 0.0
    %203 = vmatpush1.msra.mxu0 0.0
    %204 = vmatprep.subr.mxu0 0.0
    %205 = vmatpush1.msra.mxu0 0.0
    %206 = vmatprep.subr.mxu0 0.0
    %207 = vmatpush1.msra.mxu0 0.0
    %208 = vmatprep.subr.mxu0 0.0
    %209 = vmatpush1.msra.mxu0 0.0
    %210 = vmatprep.subr.mxu0 0.0
    %211 = vmatpush1.msra.mxu0 0.0
    %212 = vmatprep.subr.mxu0 0.0
    %213 = vmatpush1.msra.mxu0 0.0
    %214 = vmatprep.subr.mxu0 0.0
    %215 = vmatpush1.msra.mxu0 0.0
    %216 = vmatprep.subr.mxu0 0.0
    %217 = vmatpush1.msra.mxu0 0.0
    %218 = vmatprep.subr.mxu0 0.0
    %219 = vmatpush1.msra.mxu0 0.0
    %220 = vmatprep.subr.mxu0 0.0
    %221 = vmatpush1.msra.mxu0 0.0
    %222 = vmatprep.subr.mxu0 0.0
    %223 = vmatpush1.msra.mxu0 0.0
    %224 = vmatprep.subr.mxu0 0.0
    %225 = vmatpush1.msra.mxu0 0.0
    %226 = vmatprep.subr.mxu0 0.0
    %227 = vmatpush1.msra.mxu0 0.0
    %228 = vmatprep.subr.mxu0 0.0
    %229 = vmatpush1.msra.mxu0 0.0
    %230 = vmatprep.subr.mxu0 0.0
    %231 = vmatpush1.msra.mxu0 0.0
    %232 = vmatprep.subr.mxu0 0.0
    %233 = vmatpush1.msra.mxu0 0.0
    %234 = vmatprep.subr.mxu0 0.0
    %235 = vmatpush1.msra.mxu0 0.0
    %236 = vmatprep.mubr.f32.mxu0 0.0
    %237 = vmatmul.mubr.f32.gmra.mrb[0].mxu0 %v170
    %v238 = vpop.f32.mrb[0].mxu0
    %v239 = vadd.f32 %v166, %v238
    %v240 = vpop.f32.mrb[0].mxu0
    %241 = vdwg.mxu0
    %v242 = vld [vmem:[#allocation7] sm:$0xff]
    %v243 = vld [vmem:[#allocation10] sm:$0xff]
    %v245 = vsel %vm95, %v242, 0
    %247 = vmatprep.subr.mxu0 0.0
    %248 = vmatpush1.msra.mxu0 %v243
    %249 = vmatprep.subr.mxu0 0.0
    %250 = vmatpush1.msra.mxu0 0.0
    %251 = vmatprep.subr.mxu0 0.0
    %252 = vmatpush1.msra.mxu0 0.0
    %253 = vmatprep.subr.mxu0 0.0
    %254 = vmatpush1.msra.mxu0 0.0
    %255 = vmatprep.subr.mxu0 0.0
    %256 = vmatpush1.msra.mxu0 0.0
    %257 = vmatprep.subr.mxu0 0.0
    %258 = vmatpush1.msra.mxu0 0.0
    %259 = vmatprep.subr.mxu0 0.0
    %260 = vmatpush1.msra.mxu0 0.0
    %261 = vmatprep.subr.mxu0 0.0
    %262 = vmatpush1.msra.mxu0 0.0
    %263 = vmatprep.subr.mxu0 0.0
    %264 = vmatpush1.msra.mxu0 0.0
    %265 = vmatprep.subr.mxu0 0.0
    %266 = vmatpush1.msra.mxu0 0.0
    %267 = vmatprep.subr.mxu0 0.0
    %268 = vmatpush1.msra.mxu0 0.0
    %269 = vmatprep.subr.mxu0 0.0
    %270 = vmatpush1.msra.mxu0 0.0
    %271 = vmatprep.subr.mxu0 0.0
    %272 = vmatpush1.msra.mxu0 0.0
    %273 = vmatprep.subr.mxu0 0.0
    %274 = vmatpush1.msra.mxu0 0.0
    %275 = vmatprep.subr.mxu0 0.0
    %276 = vmatpush1.msra.mxu0 0.0
    %277 = vmatprep.subr.mxu0 0.0
    %278 = vmatpush1.msra.mxu0 0.0
    %279 = vmatprep.subr.mxu0 0.0
    %280 = vmatpush1.msra.mxu0 0.0
    %281 = vmatprep.subr.mxu0 0.0
    %282 = vmatpush1.msra.mxu0 0.0
    %283 = vmatprep.subr.mxu0 0.0
    %284 = vmatpush1.msra.mxu0 0.0
    %285 = vmatprep.subr.mxu0 0.0
    %286 = vmatpush1.msra.mxu0 0.0
    %287 = vmatprep.subr.mxu0 0.0
    %288 = vmatpush1.msra.mxu0 0.0
    %289 = vmatprep.subr.mxu0 0.0
    %290 = vmatpush1.msra.mxu0 0.0
    %291 = vmatprep.subr.mxu0 0.0
    %292 = vmatpush1.msra.mxu0 0.0
    %293 = vmatprep.subr.mxu0 0.0
    %294 = vmatpush1.msra.mxu0 0.0
    %295 = vmatprep.subr.mxu0 0.0
    %296 = vmatpush1.msra.mxu0 0.0
    %297 = vmatprep.subr.mxu0 0.0
    %298 = vmatpush1.msra.mxu0 0.0
    %299 = vmatprep.subr.mxu0 0.0
    %300 = vmatpush1.msra.mxu0 0.0
    %301 = vmatprep.subr.mxu0 0.0
    %302 = vmatpush1.msra.mxu0 0.0
    %303 = vmatprep.subr.mxu0 0.0
    %304 = vmatpush1.msra.mxu0 0.0
    %305 = vmatprep.subr.mxu0 0.0
    %306 = vmatpush1.msra.mxu0 0.0
    %307 = vmatprep.subr.mxu0 0.0
    %308 = vmatpush1.msra.mxu0 0.0
    %309 = vmatprep.subr.mxu0 0.0
    %310 = vmatpush1.msra.mxu0 0.0
    %311 = vmatprep.mubr.f32.mxu0 0.0
    %312 = vmatmul.mubr.f32.gmra.mrb[0].mxu0 %v245
    %v313 = vpop.f32.mrb[0].mxu0
    %v314 = vadd.f32 0.0, %v313
    %v315 = vpop.f32.mrb[0].mxu0
    %316 = vdwg.mxu0
    %v317 = vadd.f32 %v239, %v314
    %v318 = vld [vmem:[%s3] sm:$0xff]
    %v319 = vld [vmem:[%s7] sm:$0xff]
    %v321 = vsel %vm95, %v318, 0
    %323 = vmatprep.subr.mxu0 0.0
    %324 = vmatpush1.msra.mxu0 %v319
    %325 = vmatprep.subr.mxu0 0.0
    %326 = vmatpush1.msra.mxu0 0.0
    %327 = vmatprep.subr.mxu0 0.0
    %328 = vmatpush1.msra.mxu0 0.0
    %329 = vmatprep.subr.mxu0 0.0
    %330 = vmatpush1.msra.mxu0 0.0
    %331 = vmatprep.subr.mxu0 0.0
    %332 = vmatpush1.msra.mxu0 0.0
    %333 = vmatprep.subr.mxu0 0.0
    %334 = vmatpush1.msra.mxu0 0.0
    %335 = vmatprep.subr.mxu0 0.0
    %336 = vmatpush1.msra.mxu0 0.0
    %337 = vmatprep.subr.mxu0 0.0
    %338 = vmatpush1.msra.mxu0 0.0
    %339 = vmatprep.subr.mxu0 0.0
    %340 = vmatpush1.msra.mxu0 0.0
    %341 = vmatprep.subr.mxu0 0.0
    %342 = vmatpush1.msra.mxu0 0.0
    %343 = vmatprep.subr.mxu0 0.0
    %344 = vmatpush1.msra.mxu0 0.0
    %345 = vmatprep.subr.mxu0 0.0
    %346 = vmatpush1.msra.mxu0 0.0
    %347 = vmatprep.subr.mxu0 0.0
    %348 = vmatpush1.msra.mxu0 0.0
    %349 = vmatprep.subr.mxu0 0.0
    %350 = vmatpush1.msra.mxu0 0.0
    %351 = vmatprep.subr.mxu0 0.0
    %352 = vmatpush1.msra.mxu0 0.0
    %353 = vmatprep.subr.mxu0 0.0
    %354 = vmatpush1.msra.mxu0 0.0
    %355 = vmatprep.subr.mxu0 0.0
    %356 = vmatpush1.msra.mxu0 0.0
    %357 = vmatprep.subr.mxu0 0.0
    %358 = vmatpush1.msra.mxu0 0.0
    %359 = vmatprep.subr.mxu0 0.0
    %360 = vmatpush1.msra.mxu0 0.0
    %361 = vmatprep.subr.mxu0 0.0
    %362 = vmatpush1.msra.mxu0 0.0
    %363 = vmatprep.subr.mxu0 0.0
    %364 = vmatpush1.msra.mxu0 0.0
    %365 = vmatprep.subr.mxu0 0.0
    %366 = vmatpush1.msra.mxu0 0.0
    %367 = vmatprep.subr.mxu0 0.0
    %368 = vmatpush1.msra.mxu0 0.0
    %369 = vmatprep.subr.mxu0 0.0
    %370 = vmatpush1.msra.mxu0 0.0
    %371 = vmatprep.subr.mxu0 0.0
    %372 = vmatpush1.msra.mxu0 0.0
    %373 = vmatprep.subr.mxu0 0.0
    %374 = vmatpush1.msra.mxu0 0.0
    %375 = vmatprep.subr.mxu0 0.0
    %376 = vmatpush1.msra.mxu0 0.0
    %377 = vmatprep.subr.mxu0 0.0
    %378 = vmatpush1.msra.mxu0 0.0
    %379 = vmatprep.subr.mxu0 0.0
    %380 = vmatpush1.msra.mxu0 0.0
    %381 = vmatprep.subr.mxu0 0.0
    %382 = vmatpush1.msra.mxu0 0.0
    %383 = vmatprep.subr.mxu0 0.0
    %384 = vmatpush1.msra.mxu0 0.0
    %385 = vmatprep.subr.mxu0 0.0
    %386 = vmatpush1.msra.mxu0 0.0
    %387 = vmatprep.mubr.f32.mxu0 0.0
    %388 = vmatmul.mubr.f32.gmra.mrb[0].mxu0 %v321
    %v389 = vpop.f32.mrb[0].mxu0
    %v390 = vadd.f32 0.0, %v389
    %v391 = vpop.f32.mrb[0].mxu0
    %392 = vdwg.mxu0
    %v393 = vadd.f32 %v317, %v390
    %v394 = vld [vmem:[%s8] sm:$0x1]
    %v396 = vlaneseq
    %v397 = vshrl.u32 %v396, 7
    %v398 = vsub.s32 0, %v397
    %v399 = vrot.slane %v394, %v398
    %v401 = vadd.f32 %v393, %v399
    %402 = vst [vmem:[#allocation11] sm:$0xff] %v401
    // Predicated region
    $region58: #{tpu_custom_call.1} parent=1 // pred_check
      _
    $region59: #{tpu_custom_call.1} parent=1 // pred_check_branch
      %404 = sbr.rel (0) target = $region61
    $region60: #{tpu_custom_call.1} parent=1 // pred_region
      %s406 = ssub.s32 128, 128
      %407 = vsyncadd [#allocation4], %s406
      %s409 = sshll.u32 [#allocation11], 4
      %s410 = int_to_ptr.vmem [resolvable:$true] %s409
      %412 = dma.vmem_to_hbm [thread:$0]  %s410, 128, %s9, [#allocation4]
    $region61: #{tpu_custom_call.1} parent=1 // pred_fallthru
      _
    // Predicated region
    $region62: #{tpu_custom_call.1} parent=1 // pred_check
      _
    $region63: #{tpu_custom_call.1} parent=1 // pred_check_branch
      %414 = sbr.rel (0) target = $region65
    $region64: #{tpu_custom_call.1} parent=1 // pred_region
      %415 = dma.done [#allocation4], 128
    $region65: #{tpu_custom_call.1} parent=1 // pred_fallthru
      _
    %416 = vsyncpa [#allocation3], 1
    %417 = vsyncpa [#allocation6], 1
    %418 = vsyncpa [#allocation9], 1
    %419 = vsyncpa [#allocation4], 1

</llo_original>
